<compile_context>
chip_gen: v7x
topology: tpu7x:2x2x1
jax: 0.10.0
libtpu: 0.0.40
codegen_flags: <defaults>
</compile_context>

<pallas_src>
import functools

import jax
import jax.numpy as jnp
from jax.experimental import pallas as pl
from jax.experimental.pallas import tpu as pltpu


def _round_up(v, m):
    return ((v + m - 1) // m) * m


# ---------------------------------------------------------------------------
# Kernel
# ---------------------------------------------------------------------------
def _adapter_kernel(x_ref, w0t_ref, b0_ref, w1t_ref, b1_ref, o_ref):
    """One tile of tokens: fused down-proj -> QuickGELU -> up-proj."""
    # Cast the token tile to the weight dtype so an f32-x / bf16-weight caller
    # still takes the bf16 MXU fast path (no-op when dtypes already agree).
    x = x_ref[...].astype(w0t_ref.dtype)                                 # [tm, D_in]
    # down projection (MXU), f32 accumulation
    h = jnp.dot(x, w0t_ref[...], preferred_element_type=jnp.float32)     # [tm, R_p] f32
    h = h + b0_ref[...]                                                   # f32 bias
    # QuickGELU in f32: x * sigmoid(1.702 x)  (VPU mul + EUP sigmoid; v5e-safe)
    a = h * jax.nn.sigmoid(1.702 * h)
    # dropout(p=0) is the identity -> nothing to do
    # up projection (MXU), f32 accumulation; store straight into the unpadded
    # D_out output block (no post-kernel slice / extra HBM pass)
    a = a.astype(w1t_ref.dtype)
    out = jnp.dot(a, w1t_ref[...], preferred_element_type=jnp.float32)    # [tm, D_out]
    o_ref[...] = (out + b1_ref[...]).astype(o_ref.dtype)


# ---------------------------------------------------------------------------
# Tiling / VMEM policy
# ---------------------------------------------------------------------------
def _vmem_caps():
    """Returns (accounted VMEM budget, vmem_limit_bytes) — generation aware."""
    cap = 128 * 1024 * 1024
    try:
        info = pltpu.get_tpu_info()
        cap = int(getattr(info, "vmem_capacity_bytes", cap))
    except Exception:
        pass
    if cap <= 64 * 1024 * 1024:            # v7x-class part: 64 MiB physical VMEM
        return 26 * 1024 * 1024, 36 * 1024 * 1024
    return 32 * 1024 * 1024, 48 * 1024 * 1024  # v5e / v6e: 128 MiB physical VMEM


def _auto_tile_m(M, d_in, r_p, d_out, x_itemsize, w_itemsize, out_itemsize, budget):
    """Token-tile rows: VMEM-budgeted, capped at 512, >= 8 grid steps when possible."""
    min_itemsize = min(x_itemsize, w_itemsize, out_itemsize)
    align = 8 if min_itemsize >= 4 else (16 if min_itemsize == 2 else 32)
    # resident (single-buffered) weights + f32 biases
    fixed = (d_in * r_p + r_p * d_out) * w_itemsize + (r_p + d_out) * 4
    avail = max(budget - fixed, 1 << 20)
    # per-token-row bytes: double-buffered x / out tiles + f32 intermediates
    per_row = (2 * d_in * x_itemsize          # x tile (double-buffered)
               + 2 * d_out * out_itemsize     # out tile (double-buffered)
               + 2 * r_p * 4                  # h / activation intermediates (f32)
               + d_out * 4)                   # f32 accumulator before the output cast
    tm = (avail // max(per_row, 1)) // align * align
    tm = max(align, min(tm, 512))
    # keep >= 8 grid steps when there is enough work (>= 4 per core on v7x megacore)
    eighth = _round_up(max(pl.cdiv(M, 8), align), align)
    return max(align, min(tm, eighth))


# ---------------------------------------------------------------------------
# One-time parameter prep (hoisted out of the per-call path)
# ---------------------------------------------------------------------------
def prepare_adapter_params(w0, b0, w1, b1, compute_dtype=None):
    """Transpose / pad once at load time.

    w0 : [R, D_in]   (torch nn.Linear layout)  -> W0^T [D_in, R_p]   (compute dtype)
    b0 : [R]                                   -> [1, R_p]  f32
    w1 : [D_out, R]                            -> W1^T [R_p, D_out]  (compute dtype)
    b1 : [D_out]                               -> [1, D_out] f32
    R is zero-padded to a multiple of 128 so both MXU contractions are lane-dense;
    padded lanes stay exactly zero through QuickGELU and the second matmul.
    """
    R, _ = w0.shape
    D_out = w1.shape[0]
    R_p = _round_up(R, 128)
    cdt = jnp.dtype(compute_dtype) if compute_dtype is not None else jnp.dtype(w0.dtype)

    w0t = jnp.transpose(w0).astype(cdt)                   # [D_in, R]
    w1t = jnp.transpose(w1).astype(cdt)                   # [R, D_out]
    if R_p != R:
        w0t = jnp.pad(w0t, ((0, 0), (0, R_p - R)))
        w1t = jnp.pad(w1t, ((0, R_p - R), (0, 0)))
    b0_2d = jnp.pad(b0.astype(jnp.float32), (0, R_p - R)).reshape(1, R_p)
    b1_2d = b1.astype(jnp.float32).reshape(1, D_out)
    return w0t, b0_2d, w1t, b1_2d


# ---------------------------------------------------------------------------
# Forward
# ---------------------------------------------------------------------------
@functools.partial(jax.jit, static_argnames=("tm",))
def adapter_forward(x, w0t, b0_2d, w1t, b1_2d, *, tm=None):
    """AdapterSuper.forward (identity=False path, no gate) on prepared params.

    x : [..., D_in]; returns [..., D_out] in x.dtype.
    """
    *lead, D_in = x.shape
    R_p = w0t.shape[1]
    D_out = w1t.shape[1]
    M = 1
    for d in lead:
        M *= d

    out_dtype = x.dtype
    x2 = x.reshape(M, D_in)      # no HBM pad/copy of x; partial last block is masked

    budget, vmem_limit = _vmem_caps()
    if tm is None:
        tm = _auto_tile_m(M, D_in, R_p, D_out,
                          jnp.dtype(x.dtype).itemsize,
                          jnp.dtype(w0t.dtype).itemsize,
                          jnp.dtype(out_dtype).itemsize,
                          budget)

    num_steps = pl.cdiv(M, tm)
    grid = (num_steps,)

    resident = dict(pipeline_mode=pl.Buffered(1))   # blocks never change -> 1 buffer
    if 3 <= num_steps <= 4:
        # short grid: deepen the x pipeline so the i+1 / i+2 prefetch starts early
        x_spec = pl.BlockSpec((tm, D_in), lambda i: (i, 0),
                              pipeline_mode=pl.Buffered(3))
    else:
        x_spec = pl.BlockSpec((tm, D_in), lambda i: (i, 0))

    flops = 2 * M * D_in * R_p + 2 * M * R_p * D_out + 4 * M * R_p
    bytes_accessed = (x2.size * x2.dtype.itemsize
                      + M * D_out * jnp.dtype(out_dtype).itemsize
                      + w0t.size * w0t.dtype.itemsize
                      + w1t.size * w1t.dtype.itemsize
                      + b0_2d.size * 4 + b1_2d.size * 4)

    out2 = pl.pallas_call(
        _adapter_kernel,
        out_shape=jax.ShapeDtypeStruct((M, D_out), out_dtype),
        grid_spec=pltpu.PrefetchScalarGridSpec(
            num_scalar_prefetch=0,
            grid=grid,
            in_specs=[
                x_spec,                                                    # x (streamed)
                pl.BlockSpec((D_in, R_p), lambda i: (0, 0), **resident),   # W0^T
                pl.BlockSpec((1, R_p), lambda i: (0, 0), **resident),      # b0
                pl.BlockSpec((R_p, D_out), lambda i: (0, 0), **resident),  # W1^T
                pl.BlockSpec((1, D_out), lambda i: (0, 0), **resident),    # b1
            ],
            out_specs=pl.BlockSpec((tm, D_out), lambda i: (i, 0)),
        ),
        compiler_params=pltpu.CompilerParams(
            dimension_semantics=("parallel",),
            vmem_limit_bytes=vmem_limit,
        ),
        cost_estimate=pl.CostEstimate(
            flops=flops, transcendentals=M * R_p, bytes_accessed=bytes_accessed),
    )(x2, w0t, b0_2d, w1t, b1_2d)

    return out2.reshape(*lead, D_out)


# ---------------------------------------------------------------------------
# Reference / init (for the self-test)
# ---------------------------------------------------------------------------
def _init_params(key, embed_dims_in, embed_dims_out, reduction_dims):
    """Deterministic synthetic init matching AdapterSuper.__init__ shapes.

    ln1: Linear(embed_dims_in -> reduction_dims)  -> weight [R, D_in], bias [R]
    ln2: Linear(reduction_dims -> embed_dims_out) -> weight [D_out, R], bias [D_out]
    xavier_uniform_ for weights, normal(std=1e-6) for biases.
    """
    k0, k1, k2, k3 = jax.random.split(key, 4)

    def xavier_uniform(k, fan_out, fan_in):
        limit = (6.0 / (fan_in + fan_out)) ** 0.5
        return jax.random.uniform(
            k, (fan_out, fan_in), dtype=jnp.float32, minval=-limit, maxval=limit)

    w0 = xavier_uniform(k0, reduction_dims, embed_dims_in)
    b0 = 1e-6 * jax.random.normal(k1, (reduction_dims,), dtype=jnp.float32)
    w1 = xavier_uniform(k2, embed_dims_out, reduction_dims)
    b1 = 1e-6 * jax.random.normal(k3, (embed_dims_out,), dtype=jnp.float32)
    return w0, b0, w1, b1


def _reference(x, w0, b0, w1, b1):
    """Pure-JAX reference of the PyTorch forward (no gate, p=0 dropout)."""
    h = jnp.einsum("bnd,rd->bnr", x, w0) + b0
    a = h * jax.nn.sigmoid(1.702 * h)
    return jnp.einsum("bnr,or->bno", a, w1) + b1


if __name__ == "__main__":
    # Small deterministic example consistent with the module's forward:
    # tokens x of shape [B, N, D_in]; sample_embed_dim == reduction_dims (full width).
    B, N = 2, 8
    embed_dims_in = 32
    embed_dims_out = 32
    reduction_dims = 16

    key = jax.random.PRNGKey(0)
    kx, kp = jax.random.split(key)
    x = jax.random.normal(kx, (B, N, embed_dims_in), dtype=jnp.float32)
    w0, b0, w1, b1 = _init_params(kp, embed_dims_in, embed_dims_out, reduction_dims)

    ref = _reference(x, w0, b0, w1, b1)

    # f32 path (tight numerical check) — weights prepared once, outside the jit path
    params_f32 = prepare_adapter_params(w0, b0, w1, b1)
    out = jax.block_until_ready(adapter_forward(x, *params_f32))
    assert out.shape == (B, N, embed_dims_out), out.shape
    assert jnp.allclose(out, ref, atol=1e-5, rtol=1e-5), "f32 mismatch vs reference"

    # bf16 fast path (bf16 MXU operands, f32 accumulation) — loose check
    params_bf16 = prepare_adapter_params(w0, b0, w1, b1, compute_dtype=jnp.bfloat16)
    out_bf16 = jax.block_until_ready(
        adapter_forward(x.astype(jnp.bfloat16), *params_bf16))
    assert out_bf16.shape == (B, N, embed_dims_out), out_bf16.shape
    assert jnp.allclose(out_bf16.astype(jnp.float32), ref, atol=1e-1, rtol=5e-2), \
        "bf16 mismatch vs reference"

    print("KERNEL_OK")
</pallas_src>

<mosaic_0001>
module attributes {stable_mosaic.version = 11 : i64} {
  func.func @_adapter_kernel(%arg0: i32, %arg1: memref<8x32xf32, #tpu.memory_space<vmem>>, %arg2: memref<32x128xf32, #tpu.memory_space<vmem>>, %arg3: memref<1x128xf32, #tpu.memory_space<vmem>>, %arg4: memref<128x32xf32, #tpu.memory_space<vmem>>, %arg5: memref<1x32xf32, #tpu.memory_space<vmem>>, %arg6: memref<8x32xf32, #tpu.memory_space<vmem>>) attributes {dimension_semantics = [#tpu.dimension_semantics<parallel>], iteration_bounds = array<i64: 2>, scalar_prefetch = 0 : i64, scratch_operands = 0 : i64, tpu.core_type = #tpu.core_type<tc>, window_params = [{transform_indices = @transform_0, window_bounds = array<i64: 8, 32>}, {pipeline_mode = #tpu.pipeline_mode<synchronous>, transform_indices = @transform_1, window_bounds = array<i64: 32, 128>}, {pipeline_mode = #tpu.pipeline_mode<synchronous>, transform_indices = @transform_2, window_bounds = array<i64: 1, 128>}, {pipeline_mode = #tpu.pipeline_mode<synchronous>, transform_indices = @transform_3, window_bounds = array<i64: 128, 32>}, {pipeline_mode = #tpu.pipeline_mode<synchronous>, transform_indices = @transform_4, window_bounds = array<i64: 1, 32>}, {transform_indices = @transform_5, window_bounds = array<i64: 8, 32>}]} {
    %c0 = arith.constant 0 : index
    %c0_0 = arith.constant 0 : index
    %0 = vector.load %arg1[%c0, %c0_0] : memref<8x32xf32, #tpu.memory_space<vmem>>, vector<8x32xf32>
    %c0_1 = arith.constant 0 : index
    %c0_2 = arith.constant 0 : index
    %1 = vector.load %arg2[%c0_1, %c0_2] : memref<32x128xf32, #tpu.memory_space<vmem>>, vector<32x128xf32>
    %cst = arith.constant dense<0.000000e+00> : vector<8x128xf32>
    %2 = tpu.matmul %0, %1, %cst {dimension_numbers = #tpu.dot_dimension_numbers<[1], [0], [0], [1], [0, 0, 1, 1], [], []>} : vector<8x32xf32>, vector<32x128xf32>, vector<8x128xf32> -> vector<8x128xf32>
    %c0_3 = arith.constant 0 : index
    %c0_4 = arith.constant 0 : index
    %3 = vector.load %arg3[%c0_3, %c0_4] : memref<1x128xf32, #tpu.memory_space<vmem>>, vector<1x128xf32>
    %4 = vector.broadcast %3 : vector<1x128xf32> to vector<8x128xf32>
    %5 = arith.addf %2, %4 : vector<8x128xf32>
    %cst_5 = arith.constant 1.702000e+00 : f32
    %6 = vector.broadcast %cst_5 : f32 to vector<8x128xf32>
    %7 = arith.mulf %6, %5 : vector<8x128xf32>
    %8 = arith.negf %7 : vector<8x128xf32>
    %9 = math.exp %8 : vector<8x128xf32>
    %cst_6 = arith.constant 1.000000e+00 : f32
    %10 = vector.broadcast %cst_6 : f32 to vector<8x128xf32>
    %11 = arith.addf %10, %9 : vector<8x128xf32>
    %12 = arith.divf %10, %11 : vector<8x128xf32>
    %13 = arith.mulf %5, %12 : vector<8x128xf32>
    %c0_7 = arith.constant 0 : index
    %c0_8 = arith.constant 0 : index
    %14 = vector.load %arg4[%c0_7, %c0_8] : memref<128x32xf32, #tpu.memory_space<vmem>>, vector<128x32xf32>
    %cst_9 = arith.constant dense<0.000000e+00> : vector<8x32xf32>
    %15 = tpu.matmul %13, %14, %cst_9 {dimension_numbers = #tpu.dot_dimension_numbers<[1], [0], [0], [1], [0, 0, 1, 1], [], []>} : vector<8x128xf32>, vector<128x32xf32>, vector<8x32xf32> -> vector<8x32xf32>
    %c0_10 = arith.constant 0 : index
    %c0_11 = arith.constant 0 : index
    %16 = vector.load %arg5[%c0_10, %c0_11] : memref<1x32xf32, #tpu.memory_space<vmem>>, vector<1x32xf32>
    %17 = vector.broadcast %16 : vector<1x32xf32> to vector<8x32xf32>
    %18 = arith.addf %15, %17 : vector<8x32xf32>
    %c0_12 = arith.constant 0 : index
    %c0_13 = arith.constant 0 : index
    %19 = vector.load %arg6[%c0_12, %c0_13] : memref<8x32xf32, #tpu.memory_space<vmem>>, vector<8x32xf32>
    tpu.vector_store %arg6[%c0_12, %c0_13], %18 {strides = array<i32>} : memref<8x32xf32, #tpu.memory_space<vmem>>, vector<8x32xf32>,
    return
  }
  func.func @transform_0(%arg0: i32) -> (i32, i32) {
    %c0_i32 = arith.constant 0 : i32
    %c0_i32_0 = arith.constant 0 : i32
    return %arg0, %c0_i32 : i32, i32
  }
  func.func @transform_1(%arg0: i32) -> (i32, i32) {
    %c0_i32 = arith.constant 0 : i32
    %c0_i32_0 = arith.constant 0 : i32
    %c0_i32_1 = arith.constant 0 : i32
    return %c0_i32, %c0_i32_0 : i32, i32
  }
  func.func @transform_2(%arg0: i32) -> (i32, i32) {
    %c0_i32 = arith.constant 0 : i32
    %c0_i32_0 = arith.constant 0 : i32
    %c0_i32_1 = arith.constant 0 : i32
    return %c0_i32, %c0_i32_0 : i32, i32
  }
  func.func @transform_3(%arg0: i32) -> (i32, i32) {
    %c0_i32 = arith.constant 0 : i32
    %c0_i32_0 = arith.constant 0 : i32
    %c0_i32_1 = arith.constant 0 : i32
    return %c0_i32, %c0_i32_0 : i32, i32
  }
  func.func @transform_4(%arg0: i32) -> (i32, i32) {
    %c0_i32 = arith.constant 0 : i32
    %c0_i32_0 = arith.constant 0 : i32
    %c0_i32_1 = arith.constant 0 : i32
    return %c0_i32, %c0_i32_0 : i32, i32
  }
  func.func @transform_5(%arg0: i32) -> (i32, i32) {
    %c0_i32 = arith.constant 0 : i32
    %c0_i32_0 = arith.constant 0 : i32
    return %arg0, %c0_i32 : i32, i32
  }
}

</mosaic_0001>

<llo_original>
// kernel: adapter_forward.1
$region0: #{adapter_forward.1}
  #allocation0 [shape = 'u32[]', space=smem, size = 0x4, offset = 0x4, fixed_abs, tag = 'smem constant byte address 0x4 - core index']
  #allocation1 [shape = 'u32[144,128]{1,0:T(1,128)}', space=vmem, size = 0x12000, scoped, tag = 'internal scratch']
  %s0 = inlined_call_operand.vmem [shape: f32[16,32], index: 0, kind: input, shape index: {}]
  %s1 = inlined_call_operand.vmem [shape: f32[32,128], index: 1, kind: input, shape index: {}]
  %s2 = inlined_call_operand.vmem [shape: f32[1,128], index: 2, kind: input, shape index: {}]
  %s3 = inlined_call_operand.vmem [shape: f32[128,32], index: 3, kind: input, shape index: {}]
  %s4 = inlined_call_operand.vmem [shape: f32[1,32], index: 4, kind: input, shape index: {}]
  %s5 = inlined_call_operand.hbm [shape: f32[16,32], index: 5, kind: output, shape index: {}]
  %s6 = sld [smem:[#allocation0]]
  $region53: #{adapter_forward.1} parent=0
    _
  %s8 = ssub.s32 1, %s6
  %s9 = scalar_select 0, %s8, %s6
  $region1: #{adapter_forward.1} parent=0
    #allocation2 [shape = 'u8[8192]{0}', space=vmem, size = 0x2000, scoped, tag = 'output window, operand 0']
    #allocation3 [shape = 's32[2]{0}', space=sflag, size = 0x8, scoped, tag = 'scoped memory for adapter_forward.1']
    %10 = vsyncpa [#allocation3], 0
    %s11 = scalar_lea.sflag [#allocation3], 1
    %12 = vsyncpa %s11, 0
    loop: start=0, step=1, limit=4
    $region2: #{adapter_forward.1} parent=1 // loop_pre_header
      _
    $region3: #{adapter_forward.1} parent=1 // loop_header
      %s14 = sphi 0, %s18
      %p15 = scmp.ge.s32.totalorder %s14, 4
      %s24 = sphi 0, %s26
      %s27 = sphi 0, %s24
      %s28 = sphi 0, %s27
      %s44 = sphi 0, %s28
      %s48 = sphi 0, %s48
      %s50 = sphi 0, %s48
      %s51 = sphi 0, %s50
      %s65 = sphi 0, %s51
      %s69 = sphi 0, %s69
      %s71 = sphi 0, %s69
      %s72 = sphi 0, %s71
      %s86 = sphi 0, %s72
      %s90 = sphi 0, %s90
      %s92 = sphi 0, %s90
      %s93 = sphi 0, %s92
      %s107 = sphi 0, %s93
      %s111 = sphi 0, %s111
      %s113 = sphi 0, %s111
      %s114 = sphi 0, %s113
      %s128 = sphi 0, %s114
      %s134 = sphi 0, %s136
      %s137 = sphi 0, %s134
      %s138 = sphi 0, %s137
      %s154 = sphi 0, %s138
    $region4: #{adapter_forward.1} parent=1 // loop_header_branch
      %17 = sbr.rel (%p15) target = $region8
    $region5: #{adapter_forward.1} parent=1 // loop_body
      %s19 = ssub.s32 %s14, 1
      %s20 = ssub.s32 %s14, 2
      %s21 = sadd.s32 %s14, 1
      %s22 = ssub.s32 %s14, %s21
      %p23 = scmp.eq.s32.totalorder %s22, 0
      %s25 = sadd.s32 %s24, 1
      %s26 = scalar_select %p23, %s24, %s25
      %p29 = pneg %p23
      %p30 = scmp.eq.s32.totalorder %s14, 1
      %p31 = por %p29, %p30
      %p32 = scmp.ne.s32.totalorder %s24, %s27
      %p33 = scmp.eq.s32.totalorder %s14, 0
      %p34 = por %p32, %p33
      %p35 = scmp.ne.s32.totalorder %s24, %s27
      %p36 = scmp.eq.s32.totalorder %s19, 1
      %p37 = por %p35, %p36
      %p38 = scmp.ne.s32.totalorder %s27, %s28
      %p39 = scmp.eq.s32.totalorder %s19, 0
      %p40 = por %p38, %p39
      %p41 = scmp.ne.s32.totalorder %s27, %s28
      %p42 = scmp.eq.s32.totalorder %s20, 1
      %p43 = por %p41, %p42
      %p45 = scmp.ne.s32.totalorder %s28, %s44
      %p46 = scmp.eq.s32.totalorder %s20, 0
      %p47 = por %p45, %p46
      %s49 = sadd.s32 %s48, 1
      %p52 = scmp.eq.s32.totalorder %s14, 1
      %p53 = scmp.ne.s32.totalorder %s48, %s50
      %p54 = scmp.eq.s32.totalorder %s14, 0
      %p55 = por %p53, %p54
      %p56 = scmp.ne.s32.totalorder %s48, %s50
      %p57 = scmp.eq.s32.totalorder %s19, 1
      %p58 = por %p56, %p57
      %p59 = scmp.ne.s32.totalorder %s50, %s51
      %p60 = scmp.eq.s32.totalorder %s19, 0
      %p61 = por %p59, %p60
      %p62 = scmp.ne.s32.totalorder %s50, %s51
      %p63 = scmp.eq.s32.totalorder %s20, 1
      %p64 = por %p62, %p63
      %p66 = scmp.ne.s32.totalorder %s51, %s65
      %p67 = scmp.eq.s32.totalorder %s20, 0
      %p68 = por %p66, %p67
      %s70 = sadd.s32 %s69, 1
      %p73 = scmp.eq.s32.totalorder %s14, 1
      %p74 = scmp.ne.s32.totalorder %s69, %s71
      %p75 = scmp.eq.s32.totalorder %s14, 0
      %p76 = por %p74, %p75
      %p77 = scmp.ne.s32.totalorder %s69, %s71
      %p78 = scmp.eq.s32.totalorder %s19, 1
      %p79 = por %p77, %p78
      %p80 = scmp.ne.s32.totalorder %s71, %s72
      %p81 = scmp.eq.s32.totalorder %s19, 0
      %p82 = por %p80, %p81
      %p83 = scmp.ne.s32.totalorder %s71, %s72
      %p84 = scmp.eq.s32.totalorder %s20, 1
      %p85 = por %p83, %p84
      %p87 = scmp.ne.s32.totalorder %s72, %s86
      %p88 = scmp.eq.s32.totalorder %s20, 0
      %p89 = por %p87, %p88
      %s91 = sadd.s32 %s90, 1
      %p94 = scmp.eq.s32.totalorder %s14, 1
      %p95 = scmp.ne.s32.totalorder %s90, %s92
      %p96 = scmp.eq.s32.totalorder %s14, 0
      %p97 = por %p95, %p96
      %p98 = scmp.ne.s32.totalorder %s90, %s92
      %p99 = scmp.eq.s32.totalorder %s19, 1
      %p100 = por %p98, %p99
      %p101 = scmp.ne.s32.totalorder %s92, %s93
      %p102 = scmp.eq.s32.totalorder %s19, 0
      %p103 = por %p101, %p102
      %p104 = scmp.ne.s32.totalorder %s92, %s93
      %p105 = scmp.eq.s32.totalorder %s20, 1
      %p106 = por %p104, %p105
      %p108 = scmp.ne.s32.totalorder %s93, %s107
      %p109 = scmp.eq.s32.totalorder %s20, 0
      %p110 = por %p108, %p109
      %s112 = sadd.s32 %s111, 1
      %p115 = scmp.eq.s32.totalorder %s14, 1
      %p116 = scmp.ne.s32.totalorder %s111, %s113
      %p117 = scmp.eq.s32.totalorder %s14, 0
      %p118 = por %p116, %p117
      %p119 = scmp.ne.s32.totalorder %s111, %s113
      %p120 = scmp.eq.s32.totalorder %s19, 1
      %p121 = por %p119, %p120
      %p122 = scmp.ne.s32.totalorder %s113, %s114
      %p123 = scmp.eq.s32.totalorder %s19, 0
      %p124 = por %p122, %p123
      %p125 = scmp.ne.s32.totalorder %s113, %s114
      %p126 = scmp.eq.s32.totalorder %s20, 1
      %p127 = por %p125, %p126
      %p129 = scmp.ne.s32.totalorder %s114, %s128
      %p130 = scmp.eq.s32.totalorder %s20, 0
      %p131 = por %p129, %p130
      %s132 = ssub.s32 %s14, %s21
      %p133 = scmp.eq.s32.totalorder %s132, 0
      %s135 = sadd.s32 %s134, 1
      %s136 = scalar_select %p133, %s134, %s135
      %p139 = pneg %p133
      %p140 = scmp.eq.s32.totalorder %s14, 1
      %p141 = por %p139, %p140
      %p142 = scmp.ne.s32.totalorder %s134, %s137
      %p143 = scmp.eq.s32.totalorder %s14, 0
      %p144 = por %p142, %p143
      %p145 = scmp.ne.s32.totalorder %s134, %s137
      %p146 = scmp.eq.s32.totalorder %s19, 1
      %p147 = por %p145, %p146
      %p148 = scmp.ne.s32.totalorder %s137, %s138
      %p149 = scmp.eq.s32.totalorder %s19, 0
      %p150 = por %p148, %p149
      %p151 = scmp.ne.s32.totalorder %s137, %s138
      %p152 = scmp.eq.s32.totalorder %s20, 1
      %p153 = por %p151, %p152
      %p155 = scmp.ne.s32.totalorder %s138, %s154
      %p156 = scmp.eq.s32.totalorder %s20, 0
      %p157 = por %p155, %p156
      %p158 = scmp.le.s32.totalorder 1, %s14
      %p159 = scmp.lt.s32.totalorder %s14, 3
      %p160 = pnand %p158, %p159
      %p161 = pneg %p160
      // Predicated region
      $region9: #{adapter_forward.1} parent=5 // pred_check
        _
      $region10: #{adapter_forward.1} parent=5 // pred_check_branch
        %163 = sbr.rel (%p160) target = $region12
      $region11: #{adapter_forward.1} parent=5 // pred_region
        %s164 = ssub.s32 %s14, 1
        // Predicated region
        $region13: #{adapter_forward.1} parent=11 // pred_check
          %p165 = pneg %p61
        $region14: #{adapter_forward.1} parent=11 // pred_check_branch
          %167 = sbr.rel (%p165) target = $region16
        $region15: #{adapter_forward.1} parent=11 // pred_region
          _
        $region16: #{adapter_forward.1} parent=11 // pred_fallthru
          _
        // Predicated region
        $region17: #{adapter_forward.1} parent=11 // pred_check
          %p168 = pneg %p82
        $region18: #{adapter_forward.1} parent=11 // pred_check_branch
          %170 = sbr.rel (%p168) target = $region20
        $region19: #{adapter_forward.1} parent=11 // pred_region
          _
        $region20: #{adapter_forward.1} parent=11 // pred_fallthru
          _
        // Predicated region
        $region21: #{adapter_forward.1} parent=11 // pred_check
          %p171 = pneg %p103
        $region22: #{adapter_forward.1} parent=11 // pred_check_branch
          %173 = sbr.rel (%p171) target = $region24
        $region23: #{adapter_forward.1} parent=11 // pred_region
          _
        $region24: #{adapter_forward.1} parent=11 // pred_fallthru
          _
        // Predicated region
        $region25: #{adapter_forward.1} parent=11 // pred_check
          %p174 = pneg %p124
        $region26: #{adapter_forward.1} parent=11 // pred_check_branch
          %176 = sbr.rel (%p174) target = $region28
        $region27: #{adapter_forward.1} parent=11 // pred_region
          _
        $region28: #{adapter_forward.1} parent=11 // pred_fallthru
          _
      $region12: #{adapter_forward.1} parent=5 // pred_fallthru
        _
      %p177 = scmp.lt.s32.totalorder %s14, 2
      // Predicated region
      $region29: #{adapter_forward.1} parent=5 // pred_check
        %p178 = pneg %p177
      $region30: #{adapter_forward.1} parent=5 // pred_check_branch
        %180 = sbr.rel (%p178) target = $region32
      $region31: #{adapter_forward.1} parent=5 // pred_region
        // Predicated region
        $region33: #{adapter_forward.1} parent=31 // pred_check
          %p181 = pneg %p34
        $region34: #{adapter_forward.1} parent=31 // pred_check_branch
          %183 = sbr.rel (%p181) target = $region36
        $region35: #{adapter_forward.1} parent=31 // pred_region
          %p184 = scmp.lt.s32.totalorder %s14, 1
          %s185 = scalar_select %p184, %s14, 1
          %s186 = smul.addr %s185, 8
          %s187 = scalar_lea.vmem %s0, %s186
        $region36: #{adapter_forward.1} parent=31 // pred_fallthru
          _
      $region32: #{adapter_forward.1} parent=5 // pred_fallthru
        _
      %p188 = scmp.le.s32.totalorder 1, %s14
      %p189 = scmp.lt.s32.totalorder %s14, 3
      %p190 = pnand %p188, %p189
      %p191 = pneg %p190
      // Predicated region
      $region37: #{adapter_forward.1} parent=5 // pred_check
        _
      $region38: #{adapter_forward.1} parent=5 // pred_check_branch
        %193 = sbr.rel (%p190) target = $region40
      $region39: #{adapter_forward.1} parent=5 // pred_region
        %s194 = ssub.s32 %s14, 1
        %p195 = scmp.lt.s32.totalorder %s19, 1
        %s196 = scalar_select %p195, %s19, 1
        %s197 = smul.addr %s196, 8
        %s198 = scalar_lea.vmem %s0, %s197
        %p199 = pneg %p40
        %p200 = pneg %p37
        %p201 = pneg %p61
        %p202 = pneg %p58
        %p203 = pneg %p82
        %p204 = pneg %p79
        %p205 = pneg %p103
        %p206 = pneg %p100
        %p207 = pneg %p124
        %p208 = pneg %p121
        %p209 = pneg %p150
        %p210 = pneg %p147
        %s211 = sand.u32 %s137, 1
        %s212 = scalar_lea.sflag [#allocation3], %s211
        %s213 = sand.u32 %s137, 1
        %s214 = smul.addr %s213, 8
        %s215 = scalar_lea.vmem [#allocation2], %s214
        %p216 = scmp.lt.s32.totalorder %s19, 1
        %s217 = scalar_select %p216, %s19, 1
        %s218 = smul.addr %s217, 8
        %s219 = scalar_lea.vmem %s0, %s218
        %v220 = vld [vmem:[%s219] sm:$0xff]
        %v221 = vld [vmem:[%s1] sm:$0xff]
        %v222 = vld [vmem:[%s1 + $0x8] sm:$0xff]
        %v223 = vld [vmem:[%s1 + $0x10] sm:$0xff]
        %v224 = vld [vmem:[%s1 + $0x18] sm:$0xff]
        %v225 = vld [vmem:[%s2] sm:$0x1]
        %v227 = vlaneseq
        %v228 = vshrl.u32 %v227, 7
        %v229 = vsub.s32 0, %v228
        %v230 = vrot.slane %v225, %v229
        %vm232 = vcmask 261120
        %v234 = vsel %vm232, %v220, 0
        %236 = vmatprep.subr.mxu0 0.0
        %237 = vmatpush1.msra.mxu0 %v221
        %238 = vmatprep.subr.mxu0 0.0
        %239 = vmatpush1.msra.mxu0 %v222
        %240 = vmatprep.subr.mxu0 0.0
        %241 = vmatpush1.msra.mxu0 %v223
        %242 = vmatprep.subr.mxu0 0.0
        %243 = vmatpush1.msra.mxu0 %v224
        %244 = vmatprep.subr.mxu0 0.0
        %245 = vmatpush1.msra.mxu0 0.0
        %246 = vmatprep.subr.mxu0 0.0
        %247 = vmatpush1.msra.mxu0 0.0
        %248 = vmatprep.subr.mxu0 0.0
        %249 = vmatpush1.msra.mxu0 0.0
        %250 = vmatprep.subr.mxu0 0.0
        %251 = vmatpush1.msra.mxu0 0.0
        %252 = vmatprep.subr.mxu0 0.0
        %253 = vmatpush1.msra.mxu0 0.0
        %254 = vmatprep.subr.mxu0 0.0
        %255 = vmatpush1.msra.mxu0 0.0
        %256 = vmatprep.subr.mxu0 0.0
        %257 = vmatpush1.msra.mxu0 0.0
        %258 = vmatprep.subr.mxu0 0.0
        %259 = vmatpush1.msra.mxu0 0.0
        %260 = vmatprep.subr.mxu0 0.0
        %261 = vmatpush1.msra.mxu0 0.0
        %262 = vmatprep.subr.mxu0 0.0
        %263 = vmatpush1.msra.mxu0 0.0
        %264 = vmatprep.subr.mxu0 0.0
        %265 = vmatpush1.msra.mxu0 0.0
        %266 = vmatprep.subr.mxu0 0.0
        %267 = vmatpush1.msra.mxu0 0.0
        %268 = vmatprep.subr.mxu0 0.0
        %269 = vmatpush1.msra.mxu0 0.0
        %270 = vmatprep.subr.mxu0 0.0
        %271 = vmatpush1.msra.mxu0 0.0
        %272 = vmatprep.subr.mxu0 0.0
        %273 = vmatpush1.msra.mxu0 0.0
        %274 = vmatprep.subr.mxu0 0.0
        %275 = vmatpush1.msra.mxu0 0.0
        %276 = vmatprep.subr.mxu0 0.0
        %277 = vmatpush1.msra.mxu0 0.0
        %278 = vmatprep.subr.mxu0 0.0
        %279 = vmatpush1.msra.mxu0 0.0
        %280 = vmatprep.subr.mxu0 0.0
        %281 = vmatpush1.msra.mxu0 0.0
        %282 = vmatprep.subr.mxu0 0.0
        %283 = vmatpush1.msra.mxu0 0.0
        %284 = vmatprep.subr.mxu0 0.0
        %285 = vmatpush1.msra.mxu0 0.0
        %286 = vmatprep.subr.mxu0 0.0
        %287 = vmatpush1.msra.mxu0 0.0
        %288 = vmatprep.subr.mxu0 0.0
        %289 = vmatpush1.msra.mxu0 0.0
        %290 = vmatprep.subr.mxu0 0.0
        %291 = vmatpush1.msra.mxu0 0.0
        %292 = vmatprep.subr.mxu0 0.0
        %293 = vmatpush1.msra.mxu0 0.0
        %294 = vmatprep.subr.mxu0 0.0
        %295 = vmatpush1.msra.mxu0 0.0
        %296 = vmatprep.subr.mxu0 0.0
        %297 = vmatpush1.msra.mxu0 0.0
        %298 = vmatprep.subr.mxu0 0.0
        %299 = vmatpush1.msra.mxu0 0.0
        %300 = vmatprep.mubr.f32.mxu0 0.0
        %301 = vmatmul.mubr.f32.gmra.mrb[0].mxu0 %v234
        %v302 = vpop.f32.mrb[0].mxu0
        %v303 = vadd.f32 %v230, %v302
        %v304 = vpop.f32.mrb[0].mxu0
        %305 = vdwg.mxu0
        %v306 = vmul.f32 %v303, 1.702
        %v307 = vxor.u32 %v306, 2147483648
        %v308 = vmul.f32 %v307, 1.442695
        %v309 = vpow.pop %v308
        %v310 = vadd.f32 %v309, 1.0
        %v311 = vrcp.pop %v310
        %v312 = vmul.f32 1.0, %v311
        %v313 = vmul.f32 %v303, %v312
        %v314 = vld [vmem:[%s3] sm:$0xff]
        %v315 = vld [vmem:[%s3 + $0x8] sm:$0xff]
        %v316 = vld [vmem:[%s3 + $0x10] sm:$0xff]
        %v317 = vld [vmem:[%s3 + $0x18] sm:$0xff]
        %v318 = vld [vmem:[%s3 + $0x20] sm:$0xff]
        %v319 = vld [vmem:[%s3 + $0x28] sm:$0xff]
        %v320 = vld [vmem:[%s3 + $0x30] sm:$0xff]
        %v321 = vld [vmem:[%s3 + $0x38] sm:$0xff]
        %v322 = vld [vmem:[%s3 + $0x40] sm:$0xff]
        %v323 = vld [vmem:[%s3 + $0x48] sm:$0xff]
        %v324 = vld [vmem:[%s3 + $0x50] sm:$0xff]
        %v325 = vld [vmem:[%s3 + $0x58] sm:$0xff]
        %v326 = vld [vmem:[%s3 + $0x60] sm:$0xff]
        %v327 = vld [vmem:[%s3 + $0x68] sm:$0xff]
        %v328 = vld [vmem:[%s3 + $0x70] sm:$0xff]
        %v329 = vld [vmem:[%s3 + $0x78] sm:$0xff]
        %v330 = vld [vmem:[%s4] sm:$0x1]
        %v332 = vlaneseq
        %v333 = vshrl.u32 %v332, 7
        %v334 = vsub.s32 0, %v333
        %v335 = vrot.slane %v330, %v334
        %337 = vmatprep.subr.mxu0 0.0
        %338 = vmatpush1.msra.mxu0 %v314
        %339 = vmatprep.subr.mxu0 0.0
        %340 = vmatpush1.msra.mxu0 %v315
        %341 = vmatprep.subr.mxu0 0.0
        %342 = vmatpush1.msra.mxu0 %v316
        %343 = vmatprep.subr.mxu0 0.0
        %344 = vmatpush1.msra.mxu0 %v317
        %345 = vmatprep.subr.mxu0 0.0
        %346 = vmatpush1.msra.mxu0 %v318
        %347 = vmatprep.subr.mxu0 0.0
        %348 = vmatpush1.msra.mxu0 %v319
        %349 = vmatprep.subr.mxu0 0.0
        %350 = vmatpush1.msra.mxu0 %v320
        %351 = vmatprep.subr.mxu0 0.0
        %352 = vmatpush1.msra.mxu0 %v321
        %353 = vmatprep.subr.mxu0 0.0
        %354 = vmatpush1.msra.mxu0 %v322
        %355 = vmatprep.subr.mxu0 0.0
        %356 = vmatpush1.msra.mxu0 %v323
        %357 = vmatprep.subr.mxu0 0.0
        %358 = vmatpush1.msra.mxu0 %v324
        %359 = vmatprep.subr.mxu0 0.0
        %360 = vmatpush1.msra.mxu0 %v325
        %361 = vmatprep.subr.mxu0 0.0
        %362 = vmatpush1.msra.mxu0 %v326
        %363 = vmatprep.subr.mxu0 0.0
        %364 = vmatpush1.msra.mxu0 %v327
        %365 = vmatprep.subr.mxu0 0.0
        %366 = vmatpush1.msra.mxu0 %v328
        %367 = vmatprep.subr.mxu0 0.0
        %368 = vmatpush1.msra.mxu0 %v329
        %369 = vmatprep.subr.mxu0 0.0
        %370 = vmatpush1.msra.mxu0 0.0
        %371 = vmatprep.subr.mxu0 0.0
        %372 = vmatpush1.msra.mxu0 0.0
        %373 = vmatprep.subr.mxu0 0.0
        %374 = vmatpush1.msra.mxu0 0.0
        %375 = vmatprep.subr.mxu0 0.0
        %376 = vmatpush1.msra.mxu0 0.0
        %377 = vmatprep.subr.mxu0 0.0
        %378 = vmatpush1.msra.mxu0 0.0
        %379 = vmatprep.subr.mxu0 0.0
        %380 = vmatpush1.msra.mxu0 0.0
        %381 = vmatprep.subr.mxu0 0.0
        %382 = vmatpush1.msra.mxu0 0.0
        %383 = vmatprep.subr.mxu0 0.0
        %384 = vmatpush1.msra.mxu0 0.0
        %385 = vmatprep.subr.mxu0 0.0
        %386 = vmatpush1.msra.mxu0 0.0
        %387 = vmatprep.subr.mxu0 0.0
        %388 = vmatpush1.msra.mxu0 0.0
        %389 = vmatprep.subr.mxu0 0.0
        %390 = vmatpush1.msra.mxu0 0.0
        %391 = vmatprep.subr.mxu0 0.0
        %392 = vmatpush1.msra.mxu0 0.0
        %393 = vmatprep.subr.mxu0 0.0
        %394 = vmatpush1.msra.mxu0 0.0
        %395 = vmatprep.subr.mxu0 0.0
        %396 = vmatpush1.msra.mxu0 0.0
        %397 = vmatprep.subr.mxu0 0.0
        %398 = vmatpush1.msra.mxu0 0.0
        %399 = vmatprep.subr.mxu0 0.0
        %400 = vmatpush1.msra.mxu0 0.0
        %401 = vmatprep.mubr.f32.mxu0 0.0
        %402 = vmatmul.mubr.f32.gmra.mrb[0].mxu0 %v313
        %v403 = vpop.f32.mrb[0].mxu0
        %v404 = vadd.f32 %v335, %v403
        %v405 = vpop.f32.mrb[0].mxu0
        %406 = vdwg.mxu0
        %407 = vst.msk [vmem:[%s215] sm:$0xff] %vm232, %v404
        %s408 = sand.u32 %s137, 1
        %s409 = scalar_lea.sflag [#allocation3], %s408
        %s410 = sand.u32 %s137, 1
        %s411 = smul.addr %s410, 8
        %s412 = scalar_lea.vmem [#allocation2], %s411
        // Predicated region
        $region41: #{adapter_forward.1} parent=39 // pred_check
          %p413 = pneg %p147
        $region42: #{adapter_forward.1} parent=39 // pred_check_branch
          %415 = sbr.rel (%p413) target = $region44
        $region43: #{adapter_forward.1} parent=39 // pred_region
          %s417 = ssub.s32 128, 128
          %418 = vsyncadd %s409, %s417
          %s419 = smul.addr %s19, 128
          %s420 = scalar_lea.hbm %s5, %s419
          %s422 = sshll.u32 %s412, 4
          %s423 = int_to_ptr.vmem [resolvable:$true] %s422
          %425 = dma.vmem_to_hbm [thread:$0]  %s423, 128, %s420, %s409
        $region44: #{adapter_forward.1} parent=39 // pred_fallthru
          _
      $region40: #{adapter_forward.1} parent=5 // pred_fallthru
        _
      %p426 = scmp.le.s32.totalorder 2, %s14
      // Predicated region
      $region45: #{adapter_forward.1} parent=5 // pred_check
        %p427 = pneg %p426
      $region46: #{adapter_forward.1} parent=5 // pred_check_branch
        %429 = sbr.rel (%p427) target = $region48
      $region47: #{adapter_forward.1} parent=5 // pred_region
        %s430 = ssub.s32 %s14, 2
        // Predicated region
        $region49: #{adapter_forward.1} parent=47 // pred_check
          %p431 = pneg %p153
        $region50: #{adapter_forward.1} parent=47 // pred_check_branch
          %433 = sbr.rel (%p431) target = $region52
        $region51: #{adapter_forward.1} parent=47 // pred_region
          %s434 = sand.u32 %s138, 1
          %s435 = scalar_lea.sflag [#allocation3], %s434
          %s436 = sand.u32 %s138, 1
          %s437 = smul.addr %s436, 8
          %s438 = scalar_lea.vmem [#allocation2], %s437
          %439 = dma.done %s435, 128
        $region52: #{adapter_forward.1} parent=47 // pred_fallthru
          _
      $region48: #{adapter_forward.1} parent=5 // pred_fallthru
        _
    $region6: #{adapter_forward.1} parent=1 // loop_footer
      %s18 = sadd.s32 1, %s14
    $region7: #{adapter_forward.1} parent=1 // loop_footer_branch
      %13 = sbr.rel target = $region3
    $region8: #{adapter_forward.1} parent=1 // loop_exit
      _
    %440 = vsyncpa [#allocation3], 1
    %s441 = scalar_lea.sflag [#allocation3], 1
    %442 = vsyncpa %s441, 1

</llo_original>
